<compile_context>
chip_gen: v7x
topology: tpu7x:2x2x1
jax: 0.10.0
libtpu: 0.0.40
codegen_flags: <defaults>
</compile_context>

<pallas_src>
import functools

import jax
import jax.numpy as jnp
from jax.experimental import pallas as pl
from jax.experimental.pallas import tpu as pltpu


def _round_up(x, m):
    return (x + m - 1) // m * m


def _proj_kernel(a_ref, w_ref, b_ref, o_ref):
    # a_ref: (tm, Kp)  bf16 patch rows
    # w_ref: (Kp, Ep)  bf16 flattened conv weight (transposed)
    # b_ref: (1, Ep)   f32 bias
    # o_ref: (tm, Ep)  output tile (x.dtype)
    acc = jnp.dot(a_ref[...], w_ref[...], preferred_element_type=jnp.float32)
    o_ref[...] = (acc + b_ref[...]).astype(o_ref.dtype)


def patch_embed(x, weight, bias, patch_size, stride, *, tm=256):
    """x: (B, C, H, W); weight: (E, C, ps, ps); bias: (E,) -> (B, n_patches, E)."""
    B, C, H, W = x.shape
    E = weight.shape[0]
    ps = patch_size
    out_h = (H - ps) // stride + 1
    out_w = (W - ps) // stride + 1
    n_patches = out_h * out_w
    K = C * ps * ps
    M = B * n_patches

    # --- glue: im2col patch extraction ---
    if stride == ps and H % ps == 0 and W % ps == 0:
        # Non-overlapping patches: one fused reshape+transpose, no slicing loop.
        # Row order = (b, i, j) row-major; per-row flatten order = (C, ph, pw),
        # matching weight.reshape(E, K).
        a = (x.reshape(B, C, out_h, ps, out_w, ps)
               .transpose(0, 2, 4, 1, 3, 5)
               .reshape(M, K))
    else:
        # Overlapping strides: static slice loop (glue path, not the hot loop).
        # TODO(synk): for overlapping strides, gather patches in-kernel via a K-chunk
        # reduction axis / manual DMA instead of materializing im2col through HBM.
        rows = []
        for i in range(out_h):
            cols = []
            for j in range(out_w):
                cols.append(x[:, :, i * stride:i * stride + ps, j * stride:j * stride + ps])
            rows.append(jnp.stack(cols, axis=1))            # (B, out_w, C, ps, ps)
        patches = jnp.stack(rows, axis=1)                    # (B, out_h, out_w, C, ps, ps)
        a = patches.reshape(M, K)

    w_flat = weight.reshape(E, K).T                          # (K, E)

    # --- pad to MXU/lane-friendly shapes (zeros contribute nothing to the dot) ---
    tm_eff = min(tm, _round_up(M, 8))                        # don't over-pad tiny inputs
    Mp = _round_up(M, tm_eff)
    n_row_tiles = Mp // tm_eff
    if n_row_tiles > 1 and n_row_tiles % 2 == 1:
        Mp += tm_eff                                         # even tile count for v7x's 2 TCs
    Kp = _round_up(K, 128)
    Ep = _round_up(E, 128)

    # bf16 inputs for the MXU, f32 accumulation inside the kernel.
    a_p = jnp.zeros((Mp, Kp), jnp.bfloat16).at[:M, :K].set(a.astype(jnp.bfloat16))
    w_p = jnp.zeros((Kp, Ep), jnp.bfloat16).at[:K, :E].set(w_flat.astype(jnp.bfloat16))
    b_p = jnp.zeros((1, Ep), jnp.float32).at[0, :E].set(bias.astype(jnp.float32))

    cost = pl.CostEstimate(
        flops=2 * Mp * Kp * Ep,
        transcendentals=0,
        bytes_accessed=(Mp * Kp + Kp * Ep) * 2 + Mp * Ep * x.dtype.itemsize,
    )

    out = pl.pallas_call(
        _proj_kernel,
        out_shape=jax.ShapeDtypeStruct((Mp, Ep), x.dtype),
        grid_spec=pltpu.PrefetchScalarGridSpec(
            num_scalar_prefetch=0,
            grid=(Mp // tm_eff,),
            in_specs=[
                pl.BlockSpec((tm_eff, Kp), lambda i: (i, 0)),
                pl.BlockSpec((Kp, Ep), lambda i: (0, 0)),
                pl.BlockSpec((1, Ep), lambda i: (0, 0)),
            ],
            out_specs=pl.BlockSpec((tm_eff, Ep), lambda i: (i, 0)),
        ),
        compiler_params=pltpu.CompilerParams(
            dimension_semantics=("parallel",),
            vmem_limit_bytes=64 * 1024 * 1024,
        ),
        cost_estimate=cost,
    )(a_p, w_p, b_p)

    return out[:M, :E].reshape(B, n_patches, E)


if __name__ == "__main__":
    # Small shapes consistent with the module: img=16, patch=4, stride=4, C=4, E=32, B=2.
    B, C, H = 2, 4, 16
    patch_size, stride, embed_dim = 4, 4, 32

    key = jax.random.PRNGKey(0)
    kx, kw, kb = jax.random.split(key, 3)
    x = jax.random.normal(kx, (B, C, H, H), dtype=jnp.float32)
    weight = jax.random.normal(kw, (embed_dim, C, patch_size, patch_size), dtype=jnp.float32) * 0.02
    bias = jax.random.normal(kb, (embed_dim,), dtype=jnp.float32) * 0.02

    fn = jax.jit(functools.partial(patch_embed, patch_size=patch_size, stride=stride))
    out = fn(x, weight, bias)
    jax.block_until_ready(out)

    # pure-JAX reference: conv2d (VALID, stride) then flatten(2).transpose(1, 2)
    ref = jax.lax.conv_general_dilated(
        x, weight, window_strides=(stride, stride), padding="VALID",
        dimension_numbers=("NCHW", "OIHW", "NCHW"),
    ) + bias.reshape(1, embed_dim, 1, 1)
    ref = ref.reshape(B, embed_dim, -1).transpose(0, 2, 1)

    assert out.shape == ref.shape
    # bf16 MXU inputs (f32 accumulation) -> loosen tolerance vs pure-f32 reference.
    assert jnp.allclose(out, ref, atol=1e-2, rtol=1e-2), float(jnp.max(jnp.abs(out - ref)))
    print("KERNEL_OK")
</pallas_src>

<mosaic_0001>
module attributes {stable_mosaic.version = 11 : i64} {
  func.func @_proj_kernel(%arg0: i32, %arg1: memref<32x128xbf16, #tpu.memory_space<vmem>>, %arg2: memref<128x128xbf16, #tpu.memory_space<vmem>>, %arg3: memref<1x128xf32, #tpu.memory_space<vmem>>, %arg4: memref<32x128xf32, #tpu.memory_space<vmem>>) attributes {dimension_semantics = [#tpu.dimension_semantics<parallel>], iteration_bounds = array<i64: 1>, scalar_prefetch = 0 : i64, scratch_operands = 0 : i64, tpu.core_type = #tpu.core_type<tc>, window_params = [{transform_indices = @transform_0, window_bounds = array<i64: 32, 128>}, {pipeline_mode = #tpu.pipeline_mode<synchronous>, transform_indices = @transform_1, window_bounds = array<i64: 128, 128>}, {pipeline_mode = #tpu.pipeline_mode<synchronous>, transform_indices = @transform_2, window_bounds = array<i64: 1, 128>}, {transform_indices = @transform_3, window_bounds = array<i64: 32, 128>}]} {
    %c0 = arith.constant 0 : index
    %c0_0 = arith.constant 0 : index
    %0 = vector.load %arg1[%c0, %c0_0] : memref<32x128xbf16, #tpu.memory_space<vmem>>, vector<32x128xbf16>
    %c0_1 = arith.constant 0 : index
    %c0_2 = arith.constant 0 : index
    %1 = vector.load %arg2[%c0_1, %c0_2] : memref<128x128xbf16, #tpu.memory_space<vmem>>, vector<128x128xbf16>
    %cst = arith.constant dense<0.000000e+00> : vector<32x128xf32>
    %2 = tpu.matmul %0, %1, %cst {dimension_numbers = #tpu.dot_dimension_numbers<[1], [0], [0], [1], [0, 0, 1, 1], [], []>} : vector<32x128xbf16>, vector<128x128xbf16>, vector<32x128xf32> -> vector<32x128xf32>
    %c0_3 = arith.constant 0 : index
    %c0_4 = arith.constant 0 : index
    %3 = vector.load %arg3[%c0_3, %c0_4] : memref<1x128xf32, #tpu.memory_space<vmem>>, vector<1x128xf32>
    %4 = vector.broadcast %3 : vector<1x128xf32> to vector<32x128xf32>
    %5 = arith.addf %2, %4 : vector<32x128xf32>
    %c0_5 = arith.constant 0 : index
    %c0_6 = arith.constant 0 : index
    %6 = vector.load %arg4[%c0_5, %c0_6] : memref<32x128xf32, #tpu.memory_space<vmem>>, vector<32x128xf32>
    tpu.vector_store %arg4[%c0_5, %c0_6], %5 {strides = array<i32>} : memref<32x128xf32, #tpu.memory_space<vmem>>, vector<32x128xf32>,
    return
  }
  func.func @transform_0(%arg0: i32) -> (i32, i32) {
    %c0_i32 = arith.constant 0 : i32
    %c0_i32_0 = arith.constant 0 : i32
    return %arg0, %c0_i32 : i32, i32
  }
  func.func @transform_1(%arg0: i32) -> (i32, i32) {
    %c0_i32 = arith.constant 0 : i32
    %c0_i32_0 = arith.constant 0 : i32
    %c0_i32_1 = arith.constant 0 : i32
    return %c0_i32, %c0_i32_0 : i32, i32
  }
  func.func @transform_2(%arg0: i32) -> (i32, i32) {
    %c0_i32 = arith.constant 0 : i32
    %c0_i32_0 = arith.constant 0 : i32
    %c0_i32_1 = arith.constant 0 : i32
    return %c0_i32, %c0_i32_0 : i32, i32
  }
  func.func @transform_3(%arg0: i32) -> (i32, i32) {
    %c0_i32 = arith.constant 0 : i32
    %c0_i32_0 = arith.constant 0 : i32
    return %arg0, %c0_i32 : i32, i32
  }
}

</mosaic_0001>

<llo_original>
// kernel: patch_embed.1
$region0: #{patch_embed.1}
  #allocation0 [shape = 'u32[]', space=smem, size = 0x4, offset = 0x4, fixed_abs, tag = 'smem constant byte address 0x4 - core index']
  #allocation1 [shape = 'u32[144,128]{1,0:T(1,128)}', space=vmem, size = 0x12000, scoped, tag = 'internal scratch']
  %s0 = inlined_call_operand.hbm [shape: bf16[32,128], index: 0, kind: input, shape index: {}]
  %s1 = inlined_call_operand.hbm [shape: bf16[128,128], index: 1, kind: input, shape index: {}]
  %s2 = inlined_call_operand.hbm [shape: f32[1,128], index: 2, kind: input, shape index: {}]
  %s3 = inlined_call_operand.hbm [shape: f32[32,128], index: 3, kind: output, shape index: {}]
  %s4 = sld [smem:[#allocation0]]
  $region34: #{patch_embed.1} parent=0
    _
  %s6 = ssub.s32 1, %s4
  %s7 = scalar_select 0, %s6, %s4
  $region1: #{patch_embed.1} parent=0
    #allocation2 [shape = 'u8[8192]{0}', space=vmem, size = 0x2000, scoped, tag = 'input window, operand 0, single buffered']
    #allocation3 [shape = 's32[1]{0}', space=sflag, size = 0x4, scoped, tag = 'scoped memory for patch_embed.1']
    #allocation4 [shape = 's32[1]{0}', space=sflag, size = 0x4, scoped, tag = 'scoped memory for patch_embed.1']
    #allocation5 [shape = 'u8[32768]{0}', space=vmem, size = 0x8000, scoped, tag = 'input window, operand 1, single buffered']
    #allocation6 [shape = 's32[1]{0}', space=sflag, size = 0x4, scoped, tag = 'scoped memory for patch_embed.1']
    #allocation7 [shape = 'u8[512]{0}', space=vmem, size = 0x400, scoped, tag = 'input window, operand 2, single buffered']
    #allocation8 [shape = 'u8[16384]{0}', space=vmem, size = 0x4000, scoped, tag = 'output window, operand 0, single buffered']
    %8 = vsyncpa [#allocation3], 0
    %9 = vsyncpa [#allocation6], 0
    %10 = vsyncpa [#allocation4], 0
    // Predicated region
    $region2: #{patch_embed.1} parent=1 // pred_check
      _
    $region3: #{patch_embed.1} parent=1 // pred_check_branch
      %12 = sbr.rel (0) target = $region5
    $region4: #{patch_embed.1} parent=1 // pred_region
      %s14 = ssub.s32 256, 256
      %15 = vsyncadd [#allocation3], %s14
      %s16 = sshll.u32 [#allocation2], 4
      %s17 = int_to_ptr.vmem [resolvable:$true] %s16
      %22 = dma.hbm_to_vmem [thread:$0]  %s0, 256, %s17, [#allocation3], 64, 64, 4
    $region5: #{patch_embed.1} parent=1 // pred_fallthru
      _
    // Predicated region
    $region6: #{patch_embed.1} parent=1 // pred_check
      _
    $region7: #{patch_embed.1} parent=1 // pred_check_branch
      %24 = sbr.rel (0) target = $region9
    $region8: #{patch_embed.1} parent=1 // pred_region
      %s26 = ssub.s32 1024, 1024
      %27 = vsyncadd [#allocation6], %s26
      %s28 = sshll.u32 [#allocation5], 4
      %s29 = int_to_ptr.vmem [resolvable:$true] %s28
      %34 = dma.hbm_to_vmem [thread:$0]  %s1, 1024, %s29, [#allocation6], 64, 64, 4
    $region9: #{patch_embed.1} parent=1 // pred_fallthru
      _
    // Predicated region
    $region10: #{patch_embed.1} parent=1 // pred_check
      _
    $region11: #{patch_embed.1} parent=1 // pred_check_branch
      %36 = sbr.rel (0) target = $region13
    $region12: #{patch_embed.1} parent=1 // pred_region
      %s38 = ssub.s32 16, 16
      %39 = vsyncadd [#allocation6], %s38
      %s41 = sshll.u32 [#allocation7], 4
      %s42 = int_to_ptr.vmem [resolvable:$true] %s41
      %44 = dma.hbm_to_vmem [thread:$0]  %s2, 16, %s42, [#allocation6]
    $region13: #{patch_embed.1} parent=1 // pred_fallthru
      _
    // Predicated region
    $region14: #{patch_embed.1} parent=1 // pred_check
      _
    $region15: #{patch_embed.1} parent=1 // pred_check_branch
      %46 = sbr.rel (0) target = $region17
    $region16: #{patch_embed.1} parent=1 // pred_region
      %47 = dma.done [#allocation3], 256
    $region17: #{patch_embed.1} parent=1 // pred_fallthru
      _
    // Predicated region
    $region18: #{patch_embed.1} parent=1 // pred_check
      _
    $region19: #{patch_embed.1} parent=1 // pred_check_branch
      %49 = sbr.rel (0) target = $region21
    $region20: #{patch_embed.1} parent=1 // pred_region
      %50 = dma.done [#allocation6], 1024
    $region21: #{patch_embed.1} parent=1 // pred_fallthru
      _
    // Predicated region
    $region22: #{patch_embed.1} parent=1 // pred_check
      _
    $region23: #{patch_embed.1} parent=1 // pred_check_branch
      %52 = sbr.rel (0) target = $region25
    $region24: #{patch_embed.1} parent=1 // pred_region
      %53 = dma.done [#allocation6], 16
    $region25: #{patch_embed.1} parent=1 // pred_fallthru
      _
    %v55 = vld [vmem:[#allocation2] sm:$0xf]
    %v56 = vld [vmem:[#allocation2 + $0x4] sm:$0xf]
    %v57 = vld [vmem:[#allocation2 + $0x8] sm:$0xf]
    %v58 = vld [vmem:[#allocation2 + $0xc] sm:$0xf]
    %v59 = vld [vmem:[#allocation5] sm:$0xf]
    %v60 = vld [vmem:[#allocation5 + $0x4] sm:$0xf]
    %v61 = vld [vmem:[#allocation5 + $0x8] sm:$0xf]
    %v62 = vld [vmem:[#allocation5 + $0xc] sm:$0xf]
    %v63 = vld [vmem:[#allocation5 + $0x10] sm:$0xf]
    %v64 = vld [vmem:[#allocation5 + $0x14] sm:$0xf]
    %v65 = vld [vmem:[#allocation5 + $0x18] sm:$0xf]
    %v66 = vld [vmem:[#allocation5 + $0x1c] sm:$0xf]
    %v67 = vld [vmem:[#allocation5 + $0x20] sm:$0xf]
    %v68 = vld [vmem:[#allocation5 + $0x24] sm:$0xf]
    %v69 = vld [vmem:[#allocation5 + $0x28] sm:$0xf]
    %v70 = vld [vmem:[#allocation5 + $0x2c] sm:$0xf]
    %v71 = vld [vmem:[#allocation5 + $0x30] sm:$0xf]
    %v72 = vld [vmem:[#allocation5 + $0x34] sm:$0xf]
    %v73 = vld [vmem:[#allocation5 + $0x38] sm:$0xf]
    %v74 = vld [vmem:[#allocation5 + $0x3c] sm:$0xf]
    %v75 = vld [vmem:[#allocation7] sm:$0x1]
    %v77 = vlaneseq
    %v78 = vshrl.u32 %v77, 7
    %v79 = vsub.s32 0, %v78
    %v80 = vrot.slane %v75, %v79
    %v86 = vunpack.c.l.b16 %v55
    %v87 = vunpack.c.l.b16 %v56
    %v88 = vunpack.c.l.b16 %v57
    %v89 = vunpack.c.l.b16 %v58
    %v90 = vpack.c.b16 %v87, %v86
    %v91 = vpack.c.b16 %v89, %v88
    %v110 = vunpack.c.l.b16 %v59
    %v111 = vunpack.c.l.b16 %v60
    %v112 = vunpack.c.l.b16 %v61
    %v113 = vunpack.c.l.b16 %v62
    %v114 = vunpack.c.l.b16 %v63
    %v115 = vunpack.c.l.b16 %v64
    %v116 = vunpack.c.l.b16 %v65
    %v117 = vunpack.c.l.b16 %v66
    %v118 = vunpack.c.l.b16 %v67
    %v119 = vunpack.c.l.b16 %v68
    %v120 = vunpack.c.l.b16 %v69
    %v121 = vunpack.c.l.b16 %v70
    %v122 = vunpack.c.l.b16 %v71
    %v123 = vunpack.c.l.b16 %v72
    %v124 = vunpack.c.l.b16 %v73
    %v125 = vunpack.c.l.b16 %v74
    %v126 = vpack.c.b16 %v111, %v110
    %v127 = vpack.c.b16 %v113, %v112
    %v128 = vpack.c.b16 %v115, %v114
    %v129 = vpack.c.b16 %v117, %v116
    %v130 = vpack.c.b16 %v119, %v118
    %v131 = vpack.c.b16 %v121, %v120
    %v132 = vpack.c.b16 %v123, %v122
    %v133 = vpack.c.b16 %v125, %v124
    %142 = vmatprep.subr.bf16.mxu0 0
    %143 = vmatpush1.bf16.msra.mxu0 %v126
    %144 = vmatprep.subr.bf16.mxu0 0
    %145 = vmatpush1.bf16.msra.mxu0 %v127
    %146 = vmatprep.subr.bf16.mxu0 0
    %147 = vmatpush1.bf16.msra.mxu0 %v128
    %148 = vmatprep.subr.bf16.mxu0 0
    %149 = vmatpush1.bf16.msra.mxu0 %v129
    %150 = vmatprep.subr.bf16.mxu0 0
    %151 = vmatpush1.bf16.msra.mxu0 %v130
    %152 = vmatprep.subr.bf16.mxu0 0
    %153 = vmatpush1.bf16.msra.mxu0 %v131
    %154 = vmatprep.subr.bf16.mxu0 0
    %155 = vmatpush1.bf16.msra.mxu0 %v132
    %156 = vmatprep.subr.bf16.mxu0 0
    %157 = vmatpush1.bf16.msra.mxu0 %v133
    %158 = vmatprep.subr.bf16.mxu0 0
    %159 = vmatpush1.bf16.msra.mxu0 0
    %160 = vmatprep.subr.bf16.mxu0 0
    %161 = vmatpush1.bf16.msra.mxu0 0
    %162 = vmatprep.subr.bf16.mxu0 0
    %163 = vmatpush1.bf16.msra.mxu0 0
    %164 = vmatprep.subr.bf16.mxu0 0
    %165 = vmatpush1.bf16.msra.mxu0 0
    %166 = vmatprep.subr.bf16.mxu0 0
    %167 = vmatpush1.bf16.msra.mxu0 0
    %168 = vmatprep.subr.bf16.mxu0 0
    %169 = vmatpush1.bf16.msra.mxu0 0
    %170 = vmatprep.subr.bf16.mxu0 0
    %171 = vmatpush1.bf16.msra.mxu0 0
    %172 = vmatprep.subr.bf16.mxu0 0
    %173 = vmatpush1.bf16.msra.mxu0 0
    %174 = vmatprep.mubr.bf16.mxu0 0
    %175 = vmatmul.mubr.bf16.gmra.mrb[0].mxu0 %v90
    %v176 = vpop.f32.mrb[0].mxu0
    %v177 = vadd.f32 %v80, %v176
    %v178 = vpop.f32.mrb[0].mxu0
    %v179 = vpop.f32.mrb[0].mxu0
    %v180 = vadd.f32 %v80, %v179
    %v181 = vpop.f32.mrb[0].mxu0
    %182 = vmatprep.mubr.bf16.mxu0 0
    %183 = vmatmul.mubr.bf16.gmra.mrb[0].mxu0 %v91
    %v184 = vpop.f32.mrb[0].mxu0
    %v185 = vadd.f32 %v80, %v184
    %v186 = vpop.f32.mrb[0].mxu0
    %v187 = vpop.f32.mrb[0].mxu0
    %v188 = vadd.f32 %v80, %v187
    %v189 = vpop.f32.mrb[0].mxu0
    %190 = vdwg.mxu0
    %191 = vst [vmem:[#allocation8] sm:$0xff] %v177
    %192 = vst [vmem:[#allocation8 + $0x8] sm:$0xff] %v180
    %193 = vst [vmem:[#allocation8 + $0x10] sm:$0xff] %v185
    %194 = vst [vmem:[#allocation8 + $0x18] sm:$0xff] %v188
    // Predicated region
    $region26: #{patch_embed.1} parent=1 // pred_check
      _
    $region27: #{patch_embed.1} parent=1 // pred_check_branch
      %196 = sbr.rel (0) target = $region29
    $region28: #{patch_embed.1} parent=1 // pred_region
      %s198 = ssub.s32 512, 512
      %199 = vsyncadd [#allocation4], %s198
      %s200 = sshll.u32 [#allocation8], 4
      %s201 = int_to_ptr.vmem [resolvable:$true] %s200
      %206 = dma.vmem_to_hbm [thread:$0]  %s201, 512, %s3, [#allocation4], 128, 128, 8
    $region29: #{patch_embed.1} parent=1 // pred_fallthru
      _
    // Predicated region
    $region30: #{patch_embed.1} parent=1 // pred_check
      _
    $region31: #{patch_embed.1} parent=1 // pred_check_branch
      %208 = sbr.rel (0) target = $region33
    $region32: #{patch_embed.1} parent=1 // pred_region
      %209 = dma.done [#allocation4], 512
    $region33: #{patch_embed.1} parent=1 // pred_fallthru
      _
    %210 = vsyncpa [#allocation3], 1
    %211 = vsyncpa [#allocation6], 1
    %212 = vsyncpa [#allocation4], 1

</llo_original>
